<compile_context>
chip_gen: v5e
topology: v5e:2x2
jax: 0.10.0
libtpu: 0.0.40
codegen_flags: <defaults>
</compile_context>

<pallas_src>
import functools

import jax
import jax.numpy as jnp
from jax import lax
from jax.experimental import pallas as pl
from jax.experimental.pallas import tpu as pltpu

TEMP = 5.0      # module default temp=5
CONE_K = 0.1    # entailment-cone aperture constant
EPS = 1e-6


# ---------------- in-kernel inverse-trig helpers (Mosaic-supported ops only) ----------------
def _atan_pos(z):
    """arctan for z >= 0: minimax polynomial on [0,1] + reflection for z > 1."""
    inv = z > 1.0
    zz = jnp.where(inv, pl.reciprocal(jnp.maximum(z, EPS), approx=True), z)
    z2 = zz * zz
    p = zz * (0.9998660 + z2 * (-0.3302995 + z2 * (0.1801410
              + z2 * (-0.0851330 + 0.0208351 * z2))))
    return jnp.where(inv, (jnp.pi / 2.0) - p, p)


def _arcsin(x):
    a = jnp.abs(x)
    t = _atan_pos(a * lax.rsqrt(jnp.maximum(1.0 - a * a, EPS * EPS)))
    return jnp.where(x < 0.0, -t, t)


def _arccos(x):
    return (jnp.pi / 2.0) - _arcsin(x)


# ----------------------------------------- kernel -----------------------------------------
def split_ns_kernel(h_ref, o_ref, loss_ref):
    x = h_ref[...]                       # (D, N, TL)  "hidden"
    y = o_ref[...]                       # (D, N, TL)  "output"
    diff = y - x

    # Per-sample squared norms: reduce over the leading feature dim -> (N, TL)
    # (sample index on sublanes, pair index lane-dense).
    norm_x_sq = jnp.sum(x * x, axis=0)
    norm_y_sq = jnp.sum(y * y, axis=0)
    norm_d_sq = jnp.sum(diff * diff, axis=0)

    # rsqrt formulation: no sqrt and no full-precision divides.
    inv_nx = lax.rsqrt(jnp.maximum(norm_x_sq, EPS))
    inv_nd = lax.rsqrt(jnp.maximum(norm_d_sq, EPS))

    # entailment-cone energy E(x, y)
    cos_xi = (norm_y_sq - norm_x_sq - norm_d_sq) * 0.5 * inv_nx * inv_nd
    cos_xi = jnp.clip(cos_xi, -1.0 + EPS, 1.0 - EPS)
    xi = _arccos(cos_xi)
    psi = _arcsin(jnp.clip(CONE_K * inv_nx, -1.0 + EPS, 1.0 - EPS))
    energy = jnp.maximum(xi - psi, 0.0)

    dist = TEMP * energy * energy        # (N, TL)

    # positive sample = row 0; negatives = rows 1..N-1 (sublane-direction masked reduces).
    n_idx = lax.broadcasted_iota(jnp.int32, dist.shape, 0)
    pos = jnp.sum(jnp.where(n_idx == 0, dist, 0.0), axis=0, keepdims=True)               # (1, TL)
    neg_sum = jnp.sum(jnp.where(n_idx >= 1, jnp.exp(-dist), 0.0), axis=0, keepdims=True)  # (1, TL)

    # per-pair loss: -(pos - negs) with pos = -dist[0], negs = log(sum exp(-dist[1:]))
    loss_ref[...] = pos + jnp.log(jnp.maximum(neg_sum, EPS))


# ----------------------------------------- wrapper -----------------------------------------
def _choose_block_pairs(L, N, D, bytes_budget=2 << 20):
    """Largest lane-aligned (multiple of 128) divisor of L whose per-input block stays
    under ~2 MiB (2 inputs x 2 pipeline buffers fits v5e's 16 MiB scoped VMEM default
    and v7x's smaller VMEM); otherwise a single block covering all pairs."""
    if L % 128 != 0:
        return L
    tl = 128
    while L % (tl * 2) == 0 and D * N * (tl * 2) * 4 <= bytes_budget:
        tl *= 2
    return tl


@functools.partial(jax.jit, static_argnames=("block_pairs",))
def split_negative_sample_loss(hiddens, outputs, block_pairs=None):
    """hiddens, outputs: (L, N, D) float32 (index 0 along N = positive) -> scalar loss."""
    L, N, D = hiddens.shape
    # Layout plumbing: pair axis lane-dense, feature dim leading, sample dim on sublanes.
    h_t = jnp.transpose(hiddens.astype(jnp.float32), (2, 1, 0))   # (D, N, L)
    o_t = jnp.transpose(outputs.astype(jnp.float32), (2, 1, 0))   # (D, N, L)

    tl = block_pairs if block_pairs is not None else _choose_block_pairs(L, N, D)
    assert L % tl == 0, (L, tl)
    grid = (L // tl,)

    per_pair = pl.pallas_call(
        split_ns_kernel,
        out_shape=jax.ShapeDtypeStruct((1, L), jnp.float32),
        grid_spec=pltpu.PrefetchScalarGridSpec(
            num_scalar_prefetch=0,
            grid=grid,
            in_specs=[pl.BlockSpec((D, N, tl), lambda i: (0, 0, i)),
                      pl.BlockSpec((D, N, tl), lambda i: (0, 0, i))],
            out_specs=pl.BlockSpec((1, tl), lambda i: (0, i)),
        ),
        compiler_params=pltpu.CompilerParams(dimension_semantics=("parallel",)),
    )(h_t, o_t)

    # mean over pairs done in the wrapper (cheap; removes in-kernel finalize & SMEM accum)
    return jnp.sum(per_pair) / L


# --------------------------- pure-JAX reference (exact trig) ---------------------------
def reference_loss(hiddens, outputs):
    x = hiddens.astype(jnp.float32)
    y = outputs.astype(jnp.float32)
    norm_x_sq = jnp.sum(x * x, axis=-1)
    norm_y_sq = jnp.sum(y * y, axis=-1)
    norm_d_sq = jnp.sum((y - x) ** 2, axis=-1)
    inv_nx = lax.rsqrt(jnp.maximum(norm_x_sq, EPS))
    inv_nd = lax.rsqrt(jnp.maximum(norm_d_sq, EPS))
    cos_xi = jnp.clip((norm_y_sq - norm_x_sq - norm_d_sq) * 0.5 * inv_nx * inv_nd,
                      -1.0 + EPS, 1.0 - EPS)
    xi = jnp.arccos(cos_xi)
    psi = jnp.arcsin(jnp.clip(CONE_K * inv_nx, -1.0 + EPS, 1.0 - EPS))
    energy = jnp.maximum(xi - psi, 0.0)
    dist = TEMP * energy ** 2                                     # (L, N)
    pos = dist[:, 0]
    negs = jnp.log(jnp.maximum(jnp.sum(jnp.exp(-dist[:, 1:]), axis=-1), EPS))
    return jnp.sum(pos + negs) / hiddens.shape[0]


if __name__ == "__main__":
    # Small case matching the module's intent: 2 pairs, 1 positive + 7 negatives, 32-dim.
    key = jax.random.PRNGKey(0)
    kh, ko = jax.random.split(key)
    L, N, D = 2, 8, 32
    hiddens = jax.random.normal(kh, (L, N, D), dtype=jnp.float32)
    outputs = jax.random.normal(ko, (L, N, D), dtype=jnp.float32)

    loss = split_negative_sample_loss(hiddens, outputs)
    jax.block_until_ready(loss)
    ref = reference_loss(hiddens, outputs)
    assert jnp.allclose(loss, ref, atol=2e-2, rtol=2e-2), (loss, ref)

    # Larger case exercising the multi-block, parallel pair grid (2 blocks of 128 pairs).
    kh2, ko2 = jax.random.split(jax.random.PRNGKey(1))
    L2, N2, D2 = 256, 8, 32
    h2 = jax.random.normal(kh2, (L2, N2, D2), dtype=jnp.float32)
    o2 = jax.random.normal(ko2, (L2, N2, D2), dtype=jnp.float32)
    loss2 = split_negative_sample_loss(h2, o2, block_pairs=128)
    jax.block_until_ready(loss2)
    ref2 = reference_loss(h2, o2)
    assert jnp.allclose(loss2, ref2, atol=2e-2, rtol=2e-2), (loss2, ref2)

    print("KERNEL_OK")
</pallas_src>

<mosaic_0001>
module attributes {stable_mosaic.version = 11 : i64} {
  func.func @split_ns_kernel(%arg0: i32, %arg1: memref<32x8x2xf32, #tpu.memory_space<vmem>>, %arg2: memref<32x8x2xf32, #tpu.memory_space<vmem>>, %arg3: memref<1x2xf32, #tpu.memory_space<vmem>>) attributes {dimension_semantics = [#tpu.dimension_semantics<parallel>], iteration_bounds = array<i64: 1>, scalar_prefetch = 0 : i64, scratch_operands = 0 : i64, tpu.core_type = #tpu.core_type<tc>, window_params = [{transform_indices = @transform_0, window_bounds = array<i64: 32, 8, 2>}, {transform_indices = @transform_1, window_bounds = array<i64: 32, 8, 2>}, {transform_indices = @transform_2, window_bounds = array<i64: 1, 2>}]} {
    %c0 = arith.constant 0 : index
    %c0_0 = arith.constant 0 : index
    %c0_1 = arith.constant 0 : index
    %0 = vector.load %arg1[%c0, %c0_0, %c0_1] : memref<32x8x2xf32, #tpu.memory_space<vmem>>, vector<32x8x2xf32>
    %c0_2 = arith.constant 0 : index
    %c0_3 = arith.constant 0 : index
    %c0_4 = arith.constant 0 : index
    %1 = vector.load %arg2[%c0_2, %c0_3, %c0_4] : memref<32x8x2xf32, #tpu.memory_space<vmem>>, vector<32x8x2xf32>
    %2 = arith.subf %1, %0 : vector<32x8x2xf32>
    %3 = arith.mulf %0, %0 : vector<32x8x2xf32>
    %cst = arith.constant dense<0.000000e+00> : vector<8x2xf32>
    %4 = vector.multi_reduction <add>, %3, %cst [0] : vector<32x8x2xf32> to vector<8x2xf32>
    %5 = arith.mulf %1, %1 : vector<32x8x2xf32>
    %cst_5 = arith.constant dense<0.000000e+00> : vector<8x2xf32>
    %6 = vector.multi_reduction <add>, %5, %cst_5 [0] : vector<32x8x2xf32> to vector<8x2xf32>
    %7 = arith.mulf %2, %2 : vector<32x8x2xf32>
    %cst_6 = arith.constant dense<0.000000e+00> : vector<8x2xf32>
    %8 = vector.multi_reduction <add>, %7, %cst_6 [0] : vector<32x8x2xf32> to vector<8x2xf32>
    %cst_7 = arith.constant 9.99999997E-7 : f32
    %9 = vector.broadcast %cst_7 : f32 to vector<8x2xf32>
    %10 = arith.maximumf %4, %9 : vector<8x2xf32>
    %11 = math.rsqrt %10 : vector<8x2xf32>
    %cst_8 = arith.constant 9.99999997E-7 : f32
    %12 = vector.broadcast %cst_8 : f32 to vector<8x2xf32>
    %13 = arith.maximumf %8, %12 : vector<8x2xf32>
    %14 = math.rsqrt %13 : vector<8x2xf32>
    %15 = arith.subf %6, %4 : vector<8x2xf32>
    %16 = arith.subf %15, %8 : vector<8x2xf32>
    %cst_9 = arith.constant 5.000000e-01 : f32
    %17 = vector.broadcast %cst_9 : f32 to vector<8x2xf32>
    %18 = arith.mulf %16, %17 : vector<8x2xf32>
    %19 = arith.mulf %18, %11 : vector<8x2xf32>
    %20 = arith.mulf %19, %14 : vector<8x2xf32>
    %cst_10 = arith.constant -0.999998986 : f32
    %cst_11 = arith.constant 0.999998986 : f32
    %21 = vector.broadcast %cst_10 : f32 to vector<8x2xf32>
    %22 = arith.maximumf %21, %20 : vector<8x2xf32>
    %23 = vector.broadcast %cst_11 : f32 to vector<8x2xf32>
    %24 = arith.minimumf %23, %22 : vector<8x2xf32>
    %25 = math.absf %24 : vector<8x2xf32>
    %26 = arith.mulf %25, %25 : vector<8x2xf32>
    %cst_12 = arith.constant 1.000000e+00 : f32
    %27 = vector.broadcast %cst_12 : f32 to vector<8x2xf32>
    %28 = arith.subf %27, %26 : vector<8x2xf32>
    %cst_13 = arith.constant 9.99999996E-13 : f32
    %29 = vector.broadcast %cst_13 : f32 to vector<8x2xf32>
    %30 = arith.maximumf %28, %29 : vector<8x2xf32>
    %31 = math.rsqrt %30 : vector<8x2xf32>
    %32 = arith.mulf %25, %31 : vector<8x2xf32>
    %cst_14 = arith.constant 1.000000e+00 : f32
    %33 = vector.broadcast %cst_14 : f32 to vector<8x2xf32>
    %34 = arith.cmpf ogt, %32, %33 : vector<8x2xf32>
    %cst_15 = arith.constant 9.99999997E-7 : f32
    %35 = vector.broadcast %cst_15 : f32 to vector<8x2xf32>
    %36 = arith.maximumf %32, %35 : vector<8x2xf32>
    %37 = tpu.reciprocal %36 {approx = true} : vector<8x2xf32> -> vector<8x2xf32>
    %38 = arith.select %34, %37, %32 : vector<8x2xi1>, vector<8x2xf32>
    %39 = arith.mulf %38, %38 : vector<8x2xf32>
    %cst_16 = arith.constant 2.083510e-02 : f32
    %40 = vector.broadcast %cst_16 : f32 to vector<8x2xf32>
    %41 = arith.mulf %40, %39 : vector<8x2xf32>
    %cst_17 = arith.constant -8.513300e-02 : f32
    %42 = vector.broadcast %cst_17 : f32 to vector<8x2xf32>
    %43 = arith.addf %42, %41 : vector<8x2xf32>
    %44 = arith.mulf %39, %43 : vector<8x2xf32>
    %cst_18 = arith.constant 1.801410e-01 : f32
    %45 = vector.broadcast %cst_18 : f32 to vector<8x2xf32>
    %46 = arith.addf %45, %44 : vector<8x2xf32>
    %47 = arith.mulf %39, %46 : vector<8x2xf32>
    %cst_19 = arith.constant -0.330299497 : f32
    %48 = vector.broadcast %cst_19 : f32 to vector<8x2xf32>
    %49 = arith.addf %48, %47 : vector<8x2xf32>
    %50 = arith.mulf %39, %49 : vector<8x2xf32>
    %cst_20 = arith.constant 9.998660e-01 : f32
    %51 = vector.broadcast %cst_20 : f32 to vector<8x2xf32>
    %52 = arith.addf %51, %50 : vector<8x2xf32>
    %53 = arith.mulf %38, %52 : vector<8x2xf32>
    %cst_21 = arith.constant 1.57079637 : f32
    %54 = vector.broadcast %cst_21 : f32 to vector<8x2xf32>
    %55 = arith.subf %54, %53 : vector<8x2xf32>
    %56 = arith.select %34, %55, %53 : vector<8x2xi1>, vector<8x2xf32>
    %cst_22 = arith.constant 0.000000e+00 : f32
    %57 = vector.broadcast %cst_22 : f32 to vector<8x2xf32>
    %58 = arith.cmpf olt, %24, %57 : vector<8x2xf32>
    %cst_23 = arith.constant 0.000000e+00 : f32
    %59 = vector.broadcast %cst_23 : f32 to vector<8x2xf32>
    %60 = arith.subf %59, %56 : vector<8x2xf32>
    %61 = arith.select %58, %60, %56 : vector<8x2xi1>, vector<8x2xf32>
    %cst_24 = arith.constant 1.57079637 : f32
    %62 = vector.broadcast %cst_24 : f32 to vector<8x2xf32>
    %63 = arith.subf %62, %61 : vector<8x2xf32>
    %cst_25 = arith.constant 1.000000e-01 : f32
    %64 = vector.broadcast %cst_25 : f32 to vector<8x2xf32>
    %65 = arith.mulf %64, %11 : vector<8x2xf32>
    %cst_26 = arith.constant -0.999998986 : f32
    %cst_27 = arith.constant 0.999998986 : f32
    %66 = vector.broadcast %cst_26 : f32 to vector<8x2xf32>
    %67 = arith.maximumf %66, %65 : vector<8x2xf32>
    %68 = vector.broadcast %cst_27 : f32 to vector<8x2xf32>
    %69 = arith.minimumf %68, %67 : vector<8x2xf32>
    %70 = math.absf %69 : vector<8x2xf32>
    %71 = arith.mulf %70, %70 : vector<8x2xf32>
    %cst_28 = arith.constant 1.000000e+00 : f32
    %72 = vector.broadcast %cst_28 : f32 to vector<8x2xf32>
    %73 = arith.subf %72, %71 : vector<8x2xf32>
    %cst_29 = arith.constant 9.99999996E-13 : f32
    %74 = vector.broadcast %cst_29 : f32 to vector<8x2xf32>
    %75 = arith.maximumf %73, %74 : vector<8x2xf32>
    %76 = math.rsqrt %75 : vector<8x2xf32>
    %77 = arith.mulf %70, %76 : vector<8x2xf32>
    %cst_30 = arith.constant 1.000000e+00 : f32
    %78 = vector.broadcast %cst_30 : f32 to vector<8x2xf32>
    %79 = arith.cmpf ogt, %77, %78 : vector<8x2xf32>
    %cst_31 = arith.constant 9.99999997E-7 : f32
    %80 = vector.broadcast %cst_31 : f32 to vector<8x2xf32>
    %81 = arith.maximumf %77, %80 : vector<8x2xf32>
    %82 = tpu.reciprocal %81 {approx = true} : vector<8x2xf32> -> vector<8x2xf32>
    %83 = arith.select %79, %82, %77 : vector<8x2xi1>, vector<8x2xf32>
    %84 = arith.mulf %83, %83 : vector<8x2xf32>
    %cst_32 = arith.constant 2.083510e-02 : f32
    %85 = vector.broadcast %cst_32 : f32 to vector<8x2xf32>
    %86 = arith.mulf %85, %84 : vector<8x2xf32>
    %cst_33 = arith.constant -8.513300e-02 : f32
    %87 = vector.broadcast %cst_33 : f32 to vector<8x2xf32>
    %88 = arith.addf %87, %86 : vector<8x2xf32>
    %89 = arith.mulf %84, %88 : vector<8x2xf32>
    %cst_34 = arith.constant 1.801410e-01 : f32
    %90 = vector.broadcast %cst_34 : f32 to vector<8x2xf32>
    %91 = arith.addf %90, %89 : vector<8x2xf32>
    %92 = arith.mulf %84, %91 : vector<8x2xf32>
    %cst_35 = arith.constant -0.330299497 : f32
    %93 = vector.broadcast %cst_35 : f32 to vector<8x2xf32>
    %94 = arith.addf %93, %92 : vector<8x2xf32>
    %95 = arith.mulf %84, %94 : vector<8x2xf32>
    %cst_36 = arith.constant 9.998660e-01 : f32
    %96 = vector.broadcast %cst_36 : f32 to vector<8x2xf32>
    %97 = arith.addf %96, %95 : vector<8x2xf32>
    %98 = arith.mulf %83, %97 : vector<8x2xf32>
    %cst_37 = arith.constant 1.57079637 : f32
    %99 = vector.broadcast %cst_37 : f32 to vector<8x2xf32>
    %100 = arith.subf %99, %98 : vector<8x2xf32>
    %101 = arith.select %79, %100, %98 : vector<8x2xi1>, vector<8x2xf32>
    %cst_38 = arith.constant 0.000000e+00 : f32
    %102 = vector.broadcast %cst_38 : f32 to vector<8x2xf32>
    %103 = arith.cmpf olt, %69, %102 : vector<8x2xf32>
    %cst_39 = arith.constant 0.000000e+00 : f32
    %104 = vector.broadcast %cst_39 : f32 to vector<8x2xf32>
    %105 = arith.subf %104, %101 : vector<8x2xf32>
    %106 = arith.select %103, %105, %101 : vector<8x2xi1>, vector<8x2xf32>
    %107 = arith.subf %63, %106 : vector<8x2xf32>
    %cst_40 = arith.constant 0.000000e+00 : f32
    %108 = vector.broadcast %cst_40 : f32 to vector<8x2xf32>
    %109 = arith.maximumf %107, %108 : vector<8x2xf32>
    %cst_41 = arith.constant 5.000000e+00 : f32
    %110 = vector.broadcast %cst_41 : f32 to vector<8x2xf32>
    %111 = arith.mulf %110, %109 : vector<8x2xf32>
    %112 = arith.mulf %111, %109 : vector<8x2xf32>
    %113 = tpu.iota {dimensions = array<i32: 0>} : vector<8x2xi32>
    %c0_i32 = arith.constant 0 : i32
    %114 = vector.broadcast %c0_i32 : i32 to vector<8x2xi32>
    %115 = arith.cmpi eq, %113, %114 : vector<8x2xi32>
    %cst_42 = arith.constant 0.000000e+00 : f32
    %116 = vector.broadcast %cst_42 : f32 to vector<8x2xf32>
    %117 = arith.select %115, %112, %116 : vector<8x2xi1>, vector<8x2xf32>
    %cst_43 = arith.constant dense<0.000000e+00> : vector<2xf32>
    %118 = vector.multi_reduction <add>, %117, %cst_43 [0] : vector<8x2xf32> to vector<2xf32>
    %119 = vector.shape_cast %118 : vector<2xf32> to vector<1x2xf32>
    %c1_i32 = arith.constant 1 : i32
    %120 = vector.broadcast %c1_i32 : i32 to vector<8x2xi32>
    %121 = arith.cmpi sge, %113, %120 : vector<8x2xi32>
    %cst_44 = arith.constant 0.000000e+00 : f32
    %122 = vector.broadcast %cst_44 : f32 to vector<8x2xf32>
    %123 = arith.subf %122, %112 : vector<8x2xf32>
    %124 = math.exp %123 : vector<8x2xf32>
    %cst_45 = arith.constant 0.000000e+00 : f32
    %125 = vector.broadcast %cst_45 : f32 to vector<8x2xf32>
    %126 = arith.select %121, %124, %125 : vector<8x2xi1>, vector<8x2xf32>
    %cst_46 = arith.constant dense<0.000000e+00> : vector<2xf32>
    %127 = vector.multi_reduction <add>, %126, %cst_46 [0] : vector<8x2xf32> to vector<2xf32>
    %128 = vector.shape_cast %127 : vector<2xf32> to vector<1x2xf32>
    %cst_47 = arith.constant 9.99999997E-7 : f32
    %129 = vector.broadcast %cst_47 : f32 to vector<1x2xf32>
    %130 = arith.maximumf %128, %129 : vector<1x2xf32>
    %131 = math.log %130 : vector<1x2xf32>
    %132 = arith.addf %119, %131 : vector<1x2xf32>
    %c0_48 = arith.constant 0 : index
    %c0_49 = arith.constant 0 : index
    %133 = vector.load %arg3[%c0_48, %c0_49] : memref<1x2xf32, #tpu.memory_space<vmem>>, vector<1x2xf32>
    tpu.vector_store %arg3[%c0_48, %c0_49], %132 {strides = array<i32>} : memref<1x2xf32, #tpu.memory_space<vmem>>, vector<1x2xf32>,
    return
  }
  func.func @transform_0(%arg0: i32) -> (i32, i32, i32) {
    %c0_i32 = arith.constant 0 : i32
    %c0_i32_0 = arith.constant 0 : i32
    %c0_i32_1 = arith.constant 0 : i32
    return %c0_i32, %c0_i32_0, %arg0 : i32, i32, i32
  }
  func.func @transform_1(%arg0: i32) -> (i32, i32, i32) {
    %c0_i32 = arith.constant 0 : i32
    %c0_i32_0 = arith.constant 0 : i32
    %c0_i32_1 = arith.constant 0 : i32
    return %c0_i32, %c0_i32_0, %arg0 : i32, i32, i32
  }
  func.func @transform_2(%arg0: i32) -> (i32, i32) {
    %c0_i32 = arith.constant 0 : i32
    %c0_i32_0 = arith.constant 0 : i32
    return %c0_i32, %arg0 : i32, i32
  }
}

</mosaic_0001>

<llo_original>
// kernel: split_negative_sample_loss.1
$region0: #{split_negative_sample_loss.1}
  #allocation0 [shape = 'u32[]', space=smem, size = 0x4, offset = 0x4, fixed_abs, tag = 'smem constant byte address 0x4 - core index']
  #allocation1 [shape = 'u32[72,128]{1,0:T(1,128)}', space=vmem, size = 0x9000, scoped, tag = 'internal scratch']
  %s0 = inlined_call_operand.vmem [shape: f32[32,8,2], index: 0, kind: input, shape index: {}]
  %s1 = inlined_call_operand.vmem [shape: f32[32,8,2], index: 1, kind: input, shape index: {}]
  %s2 = inlined_call_operand.vmem [shape: f32[1,2], index: 2, kind: output, shape index: {}]
  %s3 = sld [smem:[#allocation0]]
  $region18: #{split_negative_sample_loss.1} parent=0
    _
  %s5 = ssub.s32 1, %s3
  %s6 = scalar_select 0, %s5, %s3
  // Predicated region
  $region2: #{split_negative_sample_loss.1} parent=0 // pred_check
    _
  $region3: #{split_negative_sample_loss.1} parent=0 // pred_check_branch
    %8 = sbr.rel (0) target = $region5
  $region4: #{split_negative_sample_loss.1} parent=0 // pred_region
    _
  $region5: #{split_negative_sample_loss.1} parent=0 // pred_fallthru
    _
  // Predicated region
  $region6: #{split_negative_sample_loss.1} parent=0 // pred_check
    _
  $region7: #{split_negative_sample_loss.1} parent=0 // pred_check_branch
    %10 = sbr.rel (0) target = $region9
  $region8: #{split_negative_sample_loss.1} parent=0 // pred_region
    _
  $region9: #{split_negative_sample_loss.1} parent=0 // pred_fallthru
    _
  %v11 = vld [vmem:[%s0] sm:$0xff]
  %v12 = vld [vmem:[%s0 + $0x8] sm:$0xff]
  %v13 = vld [vmem:[%s0 + $0x10] sm:$0xff]
  %v14 = vld [vmem:[%s0 + $0x18] sm:$0xff]
  %v15 = vld [vmem:[%s0 + $0x20] sm:$0xff]
  %v16 = vld [vmem:[%s0 + $0x28] sm:$0xff]
  %v17 = vld [vmem:[%s0 + $0x30] sm:$0xff]
  %v18 = vld [vmem:[%s0 + $0x38] sm:$0xff]
  %v19 = vld [vmem:[%s0 + $0x40] sm:$0xff]
  %v20 = vld [vmem:[%s0 + $0x48] sm:$0xff]
  %v21 = vld [vmem:[%s0 + $0x50] sm:$0xff]
  %v22 = vld [vmem:[%s0 + $0x58] sm:$0xff]
  %v23 = vld [vmem:[%s0 + $0x60] sm:$0xff]
  %v24 = vld [vmem:[%s0 + $0x68] sm:$0xff]
  %v25 = vld [vmem:[%s0 + $0x70] sm:$0xff]
  %v26 = vld [vmem:[%s0 + $0x78] sm:$0xff]
  %v27 = vld [vmem:[%s0 + $0x80] sm:$0xff]
  %v28 = vld [vmem:[%s0 + $0x88] sm:$0xff]
  %v29 = vld [vmem:[%s0 + $0x90] sm:$0xff]
  %v30 = vld [vmem:[%s0 + $0x98] sm:$0xff]
  %v31 = vld [vmem:[%s0 + $0xa0] sm:$0xff]
  %v32 = vld [vmem:[%s0 + $0xa8] sm:$0xff]
  %v33 = vld [vmem:[%s0 + $0xb0] sm:$0xff]
  %v34 = vld [vmem:[%s0 + $0xb8] sm:$0xff]
  %v35 = vld [vmem:[%s0 + $0xc0] sm:$0xff]
  %v36 = vld [vmem:[%s0 + $0xc8] sm:$0xff]
  %v37 = vld [vmem:[%s0 + $0xd0] sm:$0xff]
  %v38 = vld [vmem:[%s0 + $0xd8] sm:$0xff]
  %v39 = vld [vmem:[%s0 + $0xe0] sm:$0xff]
  %v40 = vld [vmem:[%s0 + $0xe8] sm:$0xff]
  %v41 = vld [vmem:[%s0 + $0xf0] sm:$0xff]
  %v42 = vld [vmem:[%s0 + $0xf8] sm:$0xff]
  %v43 = vld [vmem:[%s1] sm:$0xff]
  %v44 = vld [vmem:[%s1 + $0x8] sm:$0xff]
  %v45 = vld [vmem:[%s1 + $0x10] sm:$0xff]
  %v46 = vld [vmem:[%s1 + $0x18] sm:$0xff]
  %v47 = vld [vmem:[%s1 + $0x20] sm:$0xff]
  %v48 = vld [vmem:[%s1 + $0x28] sm:$0xff]
  %v49 = vld [vmem:[%s1 + $0x30] sm:$0xff]
  %v50 = vld [vmem:[%s1 + $0x38] sm:$0xff]
  %v51 = vld [vmem:[%s1 + $0x40] sm:$0xff]
  %v52 = vld [vmem:[%s1 + $0x48] sm:$0xff]
  %v53 = vld [vmem:[%s1 + $0x50] sm:$0xff]
  %v54 = vld [vmem:[%s1 + $0x58] sm:$0xff]
  %v55 = vld [vmem:[%s1 + $0x60] sm:$0xff]
  %v56 = vld [vmem:[%s1 + $0x68] sm:$0xff]
  %v57 = vld [vmem:[%s1 + $0x70] sm:$0xff]
  %v58 = vld [vmem:[%s1 + $0x78] sm:$0xff]
  %v59 = vld [vmem:[%s1 + $0x80] sm:$0xff]
  %v60 = vld [vmem:[%s1 + $0x88] sm:$0xff]
  %v61 = vld [vmem:[%s1 + $0x90] sm:$0xff]
  %v62 = vld [vmem:[%s1 + $0x98] sm:$0xff]
  %v63 = vld [vmem:[%s1 + $0xa0] sm:$0xff]
  %v64 = vld [vmem:[%s1 + $0xa8] sm:$0xff]
  %v65 = vld [vmem:[%s1 + $0xb0] sm:$0xff]
  %v66 = vld [vmem:[%s1 + $0xb8] sm:$0xff]
  %v67 = vld [vmem:[%s1 + $0xc0] sm:$0xff]
  %v68 = vld [vmem:[%s1 + $0xc8] sm:$0xff]
  %v69 = vld [vmem:[%s1 + $0xd0] sm:$0xff]
  %v70 = vld [vmem:[%s1 + $0xd8] sm:$0xff]
  %v71 = vld [vmem:[%s1 + $0xe0] sm:$0xff]
  %v72 = vld [vmem:[%s1 + $0xe8] sm:$0xff]
  %v73 = vld [vmem:[%s1 + $0xf0] sm:$0xff]
  %v74 = vld [vmem:[%s1 + $0xf8] sm:$0xff]
  %v75 = vsub.f32 %v43, %v11
  %v76 = vsub.f32 %v44, %v12
  %v77 = vsub.f32 %v45, %v13
  %v78 = vsub.f32 %v46, %v14
  %v79 = vsub.f32 %v47, %v15
  %v80 = vsub.f32 %v48, %v16
  %v81 = vsub.f32 %v49, %v17
  %v82 = vsub.f32 %v50, %v18
  %v83 = vsub.f32 %v51, %v19
  %v84 = vsub.f32 %v52, %v20
  %v85 = vsub.f32 %v53, %v21
  %v86 = vsub.f32 %v54, %v22
  %v87 = vsub.f32 %v55, %v23
  %v88 = vsub.f32 %v56, %v24
  %v89 = vsub.f32 %v57, %v25
  %v90 = vsub.f32 %v58, %v26
  %v91 = vsub.f32 %v59, %v27
  %v92 = vsub.f32 %v60, %v28
  %v93 = vsub.f32 %v61, %v29
  %v94 = vsub.f32 %v62, %v30
  %v95 = vsub.f32 %v63, %v31
  %v96 = vsub.f32 %v64, %v32
  %v97 = vsub.f32 %v65, %v33
  %v98 = vsub.f32 %v66, %v34
  %v99 = vsub.f32 %v67, %v35
  %v100 = vsub.f32 %v68, %v36
  %v101 = vsub.f32 %v69, %v37
  %v102 = vsub.f32 %v70, %v38
  %v103 = vsub.f32 %v71, %v39
  %v104 = vsub.f32 %v72, %v40
  %v105 = vsub.f32 %v73, %v41
  %v106 = vsub.f32 %v74, %v42
  %v107 = vmul.f32 %v11, %v11
  %v108 = vmul.f32 %v12, %v12
  %v109 = vmul.f32 %v13, %v13
  %v110 = vmul.f32 %v14, %v14
  %v111 = vmul.f32 %v15, %v15
  %v112 = vmul.f32 %v16, %v16
  %v113 = vmul.f32 %v17, %v17
  %v114 = vmul.f32 %v18, %v18
  %v115 = vmul.f32 %v19, %v19
  %v116 = vmul.f32 %v20, %v20
  %v117 = vmul.f32 %v21, %v21
  %v118 = vmul.f32 %v22, %v22
  %v119 = vmul.f32 %v23, %v23
  %v120 = vmul.f32 %v24, %v24
  %v121 = vmul.f32 %v25, %v25
  %v122 = vmul.f32 %v26, %v26
  %v123 = vmul.f32 %v27, %v27
  %v124 = vmul.f32 %v28, %v28
  %v125 = vmul.f32 %v29, %v29
  %v126 = vmul.f32 %v30, %v30
  %v127 = vmul.f32 %v31, %v31
  %v128 = vmul.f32 %v32, %v32
  %v129 = vmul.f32 %v33, %v33
  %v130 = vmul.f32 %v34, %v34
  %v131 = vmul.f32 %v35, %v35
  %v132 = vmul.f32 %v36, %v36
  %v133 = vmul.f32 %v37, %v37
  %v134 = vmul.f32 %v38, %v38
  %v135 = vmul.f32 %v39, %v39
  %v136 = vmul.f32 %v40, %v40
  %v137 = vmul.f32 %v41, %v41
  %v138 = vmul.f32 %v42, %v42
  %vm139 = vcmask 15360
  %v140 = vsel %vm139, %v107, 0.0
  %v141 = vsel %vm139, %v108, 0.0
  %v142 = vadd.f32 %v140, %v141
  %v143 = vsel %vm139, %v109, 0.0
  %v144 = vadd.f32 %v142, %v143
  %v145 = vsel %vm139, %v110, 0.0
  %v146 = vadd.f32 %v144, %v145
  %v147 = vsel %vm139, %v111, 0.0
  %v148 = vadd.f32 %v146, %v147
  %v149 = vsel %vm139, %v112, 0.0
  %v150 = vadd.f32 %v148, %v149
  %v151 = vsel %vm139, %v113, 0.0
  %v152 = vadd.f32 %v150, %v151
  %v153 = vsel %vm139, %v114, 0.0
  %v154 = vadd.f32 %v152, %v153
  %v155 = vsel %vm139, %v115, 0.0
  %v156 = vadd.f32 %v154, %v155
  %v157 = vsel %vm139, %v116, 0.0
  %v158 = vadd.f32 %v156, %v157
  %v159 = vsel %vm139, %v117, 0.0
  %v160 = vadd.f32 %v158, %v159
  %v161 = vsel %vm139, %v118, 0.0
  %v162 = vadd.f32 %v160, %v161
  %v163 = vsel %vm139, %v119, 0.0
  %v164 = vadd.f32 %v162, %v163
  %v165 = vsel %vm139, %v120, 0.0
  %v166 = vadd.f32 %v164, %v165
  %v167 = vsel %vm139, %v121, 0.0
  %v168 = vadd.f32 %v166, %v167
  %v169 = vsel %vm139, %v122, 0.0
  %v170 = vadd.f32 %v168, %v169
  %v171 = vsel %vm139, %v123, 0.0
  %v172 = vadd.f32 %v170, %v171
  %v173 = vsel %vm139, %v124, 0.0
  %v174 = vadd.f32 %v172, %v173
  %v175 = vsel %vm139, %v125, 0.0
  %v176 = vadd.f32 %v174, %v175
  %v177 = vsel %vm139, %v126, 0.0
  %v178 = vadd.f32 %v176, %v177
  %v179 = vsel %vm139, %v127, 0.0
  %v180 = vadd.f32 %v178, %v179
  %v181 = vsel %vm139, %v128, 0.0
  %v182 = vadd.f32 %v180, %v181
  %v183 = vsel %vm139, %v129, 0.0
  %v184 = vadd.f32 %v182, %v183
  %v185 = vsel %vm139, %v130, 0.0
  %v186 = vadd.f32 %v184, %v185
  %v187 = vsel %vm139, %v131, 0.0
  %v188 = vadd.f32 %v186, %v187
  %v189 = vsel %vm139, %v132, 0.0
  %v190 = vadd.f32 %v188, %v189
  %v191 = vsel %vm139, %v133, 0.0
  %v192 = vadd.f32 %v190, %v191
  %v193 = vsel %vm139, %v134, 0.0
  %v194 = vadd.f32 %v192, %v193
  %v195 = vsel %vm139, %v135, 0.0
  %v196 = vadd.f32 %v194, %v195
  %v197 = vsel %vm139, %v136, 0.0
  %v198 = vadd.f32 %v196, %v197
  %v199 = vsel %vm139, %v137, 0.0
  %v200 = vadd.f32 %v198, %v199
  %v201 = vsel %vm139, %v138, 0.0
  %v202 = vadd.f32 %v200, %v201
  %v203 = vmul.f32 %v43, %v43
  %v204 = vmul.f32 %v44, %v44
  %v205 = vmul.f32 %v45, %v45
  %v206 = vmul.f32 %v46, %v46
  %v207 = vmul.f32 %v47, %v47
  %v208 = vmul.f32 %v48, %v48
  %v209 = vmul.f32 %v49, %v49
  %v210 = vmul.f32 %v50, %v50
  %v211 = vmul.f32 %v51, %v51
  %v212 = vmul.f32 %v52, %v52
  %v213 = vmul.f32 %v53, %v53
  %v214 = vmul.f32 %v54, %v54
  %v215 = vmul.f32 %v55, %v55
  %v216 = vmul.f32 %v56, %v56
  %v217 = vmul.f32 %v57, %v57
  %v218 = vmul.f32 %v58, %v58
  %v219 = vmul.f32 %v59, %v59
  %v220 = vmul.f32 %v60, %v60
  %v221 = vmul.f32 %v61, %v61
  %v222 = vmul.f32 %v62, %v62
  %v223 = vmul.f32 %v63, %v63
  %v224 = vmul.f32 %v64, %v64
  %v225 = vmul.f32 %v65, %v65
  %v226 = vmul.f32 %v66, %v66
  %v227 = vmul.f32 %v67, %v67
  %v228 = vmul.f32 %v68, %v68
  %v229 = vmul.f32 %v69, %v69
  %v230 = vmul.f32 %v70, %v70
  %v231 = vmul.f32 %v71, %v71
  %v232 = vmul.f32 %v72, %v72
  %v233 = vmul.f32 %v73, %v73
  %v234 = vmul.f32 %v74, %v74
  %v235 = vsel %vm139, %v203, 0.0
  %v236 = vsel %vm139, %v204, 0.0
  %v237 = vadd.f32 %v235, %v236
  %v238 = vsel %vm139, %v205, 0.0
  %v239 = vadd.f32 %v237, %v238
  %v240 = vsel %vm139, %v206, 0.0
  %v241 = vadd.f32 %v239, %v240
  %v242 = vsel %vm139, %v207, 0.0
  %v243 = vadd.f32 %v241, %v242
  %v244 = vsel %vm139, %v208, 0.0
  %v245 = vadd.f32 %v243, %v244
  %v246 = vsel %vm139, %v209, 0.0
  %v247 = vadd.f32 %v245, %v246
  %v248 = vsel %vm139, %v210, 0.0
  %v249 = vadd.f32 %v247, %v248
  %v250 = vsel %vm139, %v211, 0.0
  %v251 = vadd.f32 %v249, %v250
  %v252 = vsel %vm139, %v212, 0.0
  %v253 = vadd.f32 %v251, %v252
  %v254 = vsel %vm139, %v213, 0.0
  %v255 = vadd.f32 %v253, %v254
  %v256 = vsel %vm139, %v214, 0.0
  %v257 = vadd.f32 %v255, %v256
  %v258 = vsel %vm139, %v215, 0.0
  %v259 = vadd.f32 %v257, %v258
  %v260 = vsel %vm139, %v216, 0.0
  %v261 = vadd.f32 %v259, %v260
  %v262 = vsel %vm139, %v217, 0.0
  %v263 = vadd.f32 %v261, %v262
  %v264 = vsel %vm139, %v218, 0.0
  %v265 = vadd.f32 %v263, %v264
  %v266 = vsel %vm139, %v219, 0.0
  %v267 = vadd.f32 %v265, %v266
  %v268 = vsel %vm139, %v220, 0.0
  %v269 = vadd.f32 %v267, %v268
  %v270 = vsel %vm139, %v221, 0.0
  %v271 = vadd.f32 %v269, %v270
  %v272 = vsel %vm139, %v222, 0.0
  %v273 = vadd.f32 %v271, %v272
  %v274 = vsel %vm139, %v223, 0.0
  %v275 = vadd.f32 %v273, %v274
  %v276 = vsel %vm139, %v224, 0.0
  %v277 = vadd.f32 %v275, %v276
  %v278 = vsel %vm139, %v225, 0.0
  %v279 = vadd.f32 %v277, %v278
  %v280 = vsel %vm139, %v226, 0.0
  %v281 = vadd.f32 %v279, %v280
  %v282 = vsel %vm139, %v227, 0.0
  %v283 = vadd.f32 %v281, %v282
  %v284 = vsel %vm139, %v228, 0.0
  %v285 = vadd.f32 %v283, %v284
  %v286 = vsel %vm139, %v229, 0.0
  %v287 = vadd.f32 %v285, %v286
  %v288 = vsel %vm139, %v230, 0.0
  %v289 = vadd.f32 %v287, %v288
  %v290 = vsel %vm139, %v231, 0.0
  %v291 = vadd.f32 %v289, %v290
  %v292 = vsel %vm139, %v232, 0.0
  %v293 = vadd.f32 %v291, %v292
  %v294 = vsel %vm139, %v233, 0.0
  %v295 = vadd.f32 %v293, %v294
  %v296 = vsel %vm139, %v234, 0.0
  %v297 = vadd.f32 %v295, %v296
  %v298 = vmul.f32 %v75, %v75
  %v299 = vmul.f32 %v76, %v76
  %v300 = vmul.f32 %v77, %v77
  %v301 = vmul.f32 %v78, %v78
  %v302 = vmul.f32 %v79, %v79
  %v303 = vmul.f32 %v80, %v80
  %v304 = vmul.f32 %v81, %v81
  %v305 = vmul.f32 %v82, %v82
  %v306 = vmul.f32 %v83, %v83
  %v307 = vmul.f32 %v84, %v84
  %v308 = vmul.f32 %v85, %v85
  %v309 = vmul.f32 %v86, %v86
  %v310 = vmul.f32 %v87, %v87
  %v311 = vmul.f32 %v88, %v88
  %v312 = vmul.f32 %v89, %v89
  %v313 = vmul.f32 %v90, %v90
  %v314 = vmul.f32 %v91, %v91
  %v315 = vmul.f32 %v92, %v92
  %v316 = vmul.f32 %v93, %v93
  %v317 = vmul.f32 %v94, %v94
  %v318 = vmul.f32 %v95, %v95
  %v319 = vmul.f32 %v96, %v96
  %v320 = vmul.f32 %v97, %v97
  %v321 = vmul.f32 %v98, %v98
  %v322 = vmul.f32 %v99, %v99
  %v323 = vmul.f32 %v100, %v100
  %v324 = vmul.f32 %v101, %v101
  %v325 = vmul.f32 %v102, %v102
  %v326 = vmul.f32 %v103, %v103
  %v327 = vmul.f32 %v104, %v104
  %v328 = vmul.f32 %v105, %v105
  %v329 = vmul.f32 %v106, %v106
  %v330 = vsel %vm139, %v298, 0.0
  %v331 = vsel %vm139, %v299, 0.0
  %v332 = vadd.f32 %v330, %v331
  %v333 = vsel %vm139, %v300, 0.0
  %v334 = vadd.f32 %v332, %v333
  %v335 = vsel %vm139, %v301, 0.0
  %v336 = vadd.f32 %v334, %v335
  %v337 = vsel %vm139, %v302, 0.0
  %v338 = vadd.f32 %v336, %v337
  %v339 = vsel %vm139, %v303, 0.0
  %v340 = vadd.f32 %v338, %v339
  %v341 = vsel %vm139, %v304, 0.0
  %v342 = vadd.f32 %v340, %v341
  %v343 = vsel %vm139, %v305, 0.0
  %v344 = vadd.f32 %v342, %v343
  %v345 = vsel %vm139, %v306, 0.0
  %v346 = vadd.f32 %v344, %v345
  %v347 = vsel %vm139, %v307, 0.0
  %v348 = vadd.f32 %v346, %v347
  %v349 = vsel %vm139, %v308, 0.0
  %v350 = vadd.f32 %v348, %v349
  %v351 = vsel %vm139, %v309, 0.0
  %v352 = vadd.f32 %v350, %v351
  %v353 = vsel %vm139, %v310, 0.0
  %v354 = vadd.f32 %v352, %v353
  %v355 = vsel %vm139, %v311, 0.0
  %v356 = vadd.f32 %v354, %v355
  %v357 = vsel %vm139, %v312, 0.0
  %v358 = vadd.f32 %v356, %v357
  %v359 = vsel %vm139, %v313, 0.0
  %v360 = vadd.f32 %v358, %v359
  %v361 = vsel %vm139, %v314, 0.0
  %v362 = vadd.f32 %v360, %v361
  %v363 = vsel %vm139, %v315, 0.0
  %v364 = vadd.f32 %v362, %v363
  %v365 = vsel %vm139, %v316, 0.0
  %v366 = vadd.f32 %v364, %v365
  %v367 = vsel %vm139, %v317, 0.0
  %v368 = vadd.f32 %v366, %v367
  %v369 = vsel %vm139, %v318, 0.0
  %v370 = vadd.f32 %v368, %v369
  %v371 = vsel %vm139, %v319, 0.0
  %v372 = vadd.f32 %v370, %v371
  %v373 = vsel %vm139, %v320, 0.0
  %v374 = vadd.f32 %v372, %v373
  %v375 = vsel %vm139, %v321, 0.0
  %v376 = vadd.f32 %v374, %v375
  %v377 = vsel %vm139, %v322, 0.0
  %v378 = vadd.f32 %v376, %v377
  %v379 = vsel %vm139, %v323, 0.0
  %v380 = vadd.f32 %v378, %v379
  %v381 = vsel %vm139, %v324, 0.0
  %v382 = vadd.f32 %v380, %v381
  %v383 = vsel %vm139, %v325, 0.0
  %v384 = vadd.f32 %v382, %v383
  %v385 = vsel %vm139, %v326, 0.0
  %v386 = vadd.f32 %v384, %v385
  %v387 = vsel %vm139, %v327, 0.0
  %v388 = vadd.f32 %v386, %v387
  %v389 = vsel %vm139, %v328, 0.0
  %v390 = vadd.f32 %v388, %v389
  %v391 = vsel %vm139, %v329, 0.0
  %v392 = vadd.f32 %v390, %v391
  %v393 = vmax.f32 %v202, 1e-06
  %v394 = vrsqrt.pop %v393
  %v395 = vmul.f32 %v394, %v393
  %v396 = vmul.f32 %v395, %v394
  %v397 = vmul.f32 0.5, %v396
  %v398 = vsub.f32 1.5, %v397
  %v399 = vmul.f32 %v394, %v398
  %vm400 = vweird.f32 %v393
  %vm401 = vweird.f32 %v394
  %vm402 = vmor %vm400, %vm401
  %v403 = vsel %vm402, %v394, %v399
  %v404 = vmax.f32 %v392, 1e-06
  %v405 = vrsqrt.pop %v404
  %v406 = vmul.f32 %v405, %v404
  %v407 = vmul.f32 %v406, %v405
  %v408 = vmul.f32 0.5, %v407
  %v409 = vsub.f32 1.5, %v408
  %v410 = vmul.f32 %v405, %v409
  %vm411 = vweird.f32 %v404
  %vm412 = vweird.f32 %v405
  %vm413 = vmor %vm411, %vm412
  %v414 = vsel %vm413, %v405, %v410
  %v415 = vsub.f32 %v297, %v202
  %v416 = vsub.f32 %v415, %v392
  %v417 = vmul.f32 %v416, 0.5
  %v418 = vmul.f32 %v417, %v403
  %v419 = vmul.f32 %v418, %v414
  %v420 = vmax.f32 %v419, -0.999999
  %v421 = vmin.f32 %v420, 0.999999
  %v422 = vand.u32 2147483647, %v421
  %v423 = vmul.f32 %v422, %v422
  %v424 = vsub.f32 1.0, %v423
  %v425 = vmax.f32 %v424, 1e-12
  %v426 = vrsqrt.pop %v425
  %v427 = vmul.f32 %v426, %v425
  %v428 = vmul.f32 %v427, %v426
  %v429 = vmul.f32 0.5, %v428
  %v430 = vsub.f32 1.5, %v429
  %v431 = vmul.f32 %v426, %v430
  %vm432 = vweird.f32 %v425
  %vm433 = vweird.f32 %v426
  %vm434 = vmor %vm432, %vm433
  %v435 = vsel %vm434, %v426, %v431
  %v436 = vmul.f32 %v422, %v435
  %vm437 = vcmp.gt.f32.partialorder %v436, 1.0
  %v438 = vmax.f32 %v436, 1e-06
  %v439 = vrcp.pop %v438
  %v440 = vsel %vm437, %v439, %v436
  %v441 = vmul.f32 %v440, %v440
  %v442 = vmul.f32 %v441, 0.0208351
  %v443 = vadd.f32 %v442, -0.085133
  %v444 = vmul.f32 %v441, %v443
  %v445 = vadd.f32 %v444, 0.180141
  %v446 = vmul.f32 %v441, %v445
  %v447 = vadd.f32 %v446, -0.3302995
  %v448 = vmul.f32 %v441, %v447
  %v449 = vadd.f32 %v448, 0.999866
  %v450 = vmul.f32 %v440, %v449
  %v451 = vsub.f32 1.5707964, %v450
  %v452 = vsel %vm437, %v451, %v450
  %vm453 = vcmp.lt.f32.partialorder %v421, 0.0
  %v454 = vsub.f32 0.0, %v452
  %v455 = vsel %vm453, %v454, %v452
  %v456 = vsub.f32 1.5707964, %v455
  %v457 = vmul.f32 %v403, 0.1
  %v458 = vmax.f32 %v457, -0.999999
  %v459 = vmin.f32 %v458, 0.999999
  %v460 = vand.u32 2147483647, %v459
  %v461 = vmul.f32 %v460, %v460
  %v462 = vsub.f32 1.0, %v461
  %v463 = vmax.f32 %v462, 1e-12
  %v464 = vrsqrt.pop %v463
  %v465 = vmul.f32 %v464, %v463
  %v466 = vmul.f32 %v465, %v464
  %v467 = vmul.f32 0.5, %v466
  %v468 = vsub.f32 1.5, %v467
  %v469 = vmul.f32 %v464, %v468
  %vm470 = vweird.f32 %v463
  %vm471 = vweird.f32 %v464
  %vm472 = vmor %vm470, %vm471
  %v473 = vsel %vm472, %v464, %v469
  %v474 = vmul.f32 %v460, %v473
  %vm475 = vcmp.gt.f32.partialorder %v474, 1.0
  %v476 = vmax.f32 %v474, 1e-06
  %v477 = vrcp.pop %v476
  %v478 = vsel %vm475, %v477, %v474
  %v479 = vmul.f32 %v478, %v478
  %v480 = vmul.f32 %v479, 0.0208351
  %v481 = vadd.f32 %v480, -0.085133
  %v482 = vmul.f32 %v479, %v481
  %v483 = vadd.f32 %v482, 0.180141
  %v484 = vmul.f32 %v479, %v483
  %v485 = vadd.f32 %v484, -0.3302995
  %v486 = vmul.f32 %v479, %v485
  %v487 = vadd.f32 %v486, 0.999866
  %v488 = vmul.f32 %v478, %v487
  %v489 = vsub.f32 1.5707964, %v488
  %v490 = vsel %vm475, %v489, %v488
  %vm491 = vcmp.lt.f32.partialorder %v459, 0.0
  %v492 = vsub.f32 0.0, %v490
  %v493 = vsel %vm491, %v492, %v490
  %v494 = vsub.f32 %v456, %v493
  %v495 = vmax.f32 %v494, 0.0
  %v496 = vmul.f32 %v495, 5.0
  %v497 = vmul.f32 %v496, %v495
  %v498 = vlaneseq
  %v499 = vshrl.u32 %v498, 7
  %vm500 = vcmp.eq.s32.totalorder %v499, 0
  %v501 = vsel %vm500, %v497, 0.0
  %v502 = vsel %vm139, %v501, 0.0
  %v503 = vrot.slane %v502, 4
  %v504 = vadd.f32 %v502, %v503
  %v505 = vrot.slane %v504, 2
  %v506 = vadd.f32 %v504, %v505
  %v507 = vrot.slane %v506, 1
  %v508 = vadd.f32 %v506, %v507
  %vm509 = vcmp.ge.s32.totalorder %v499, 1
  %v510 = vsub.f32 0.0, %v497
  %v511 = vmul.f32 %v510, 1.442695
  %v512 = vpow.pop %v511
  %v513 = vsel %vm509, %v512, 0.0
  %v514 = vsel %vm139, %v513, 0.0
  %v515 = vrot.slane %v514, 4
  %v516 = vadd.f32 %v514, %v515
  %v517 = vrot.slane %v516, 2
  %v518 = vadd.f32 %v516, %v517
  %v519 = vrot.slane %v518, 1
  %v520 = vadd.f32 %v518, %v519
  %v521 = vmax.f32 %v520, 1e-06
  %v522 = vlog2.pop %v521
  %v523 = vmul.f32 %v522, 0.6931472
  %v524 = vadd.f32 %v508, %v523
  %vm525 = vcmask 8192
  %526 = vst.msk [vmem:[%s2] sm:$0x1] %vm525, %v524
  // Predicated region
  $region10: #{split_negative_sample_loss.1} parent=0 // pred_check
    _
  $region11: #{split_negative_sample_loss.1} parent=0 // pred_check_branch
    %528 = sbr.rel (0) target = $region13
  $region12: #{split_negative_sample_loss.1} parent=0 // pred_region
    _
  $region13: #{split_negative_sample_loss.1} parent=0 // pred_fallthru
    _
  // Predicated region
  $region14: #{split_negative_sample_loss.1} parent=0 // pred_check
    _
  $region15: #{split_negative_sample_loss.1} parent=0 // pred_check_branch
    %530 = sbr.rel (0) target = $region17
  $region16: #{split_negative_sample_loss.1} parent=0 // pred_region
    _
  $region17: #{split_negative_sample_loss.1} parent=0 // pred_fallthru
    _

</llo_original>
